<compile_context>
chip_gen: v7x
topology: tpu7x:2x2x1
jax: 0.10.0
libtpu: 0.0.40
codegen_flags: <defaults>
</compile_context>

<pallas_src>
import jax
import jax.numpy as jnp
from jax.experimental import pallas as pl
from jax.experimental.pallas import tpu as pltpu


def _policy_kernel(x_ref, w1_ref, b1_ref, w2_ref, b2_ref, o_ref):
    # x:  [TB, S] bf16   w1: [S, H] bf16   b1: [1, H] f32
    # w2: [H, A] bf16    b2: [1, A] f32    o:  [TB, A] f32
    x = x_ref[...]
    # First matmul on the MXU (bf16 in, f32 accumulate), elementwise in f32.
    h = jnp.dot(x, w1_ref[...], preferred_element_type=jnp.float32)
    h = jnp.maximum(h + b1_ref[...], 0.0)  # bias + ReLU in f32
    # Second matmul: cast activations back to bf16 for the MXU.
    logits = (
        jnp.dot(h.astype(w2_ref.dtype), w2_ref[...], preferred_element_type=jnp.float32)
        + b2_ref[...]
    )
    # Softmax over the action (lane) axis, max-subtracted, f32 throughout.
    m = jnp.max(logits, axis=-1, keepdims=True)
    e = jnp.exp(logits - m)
    denom = jnp.sum(e, axis=-1, keepdims=True)
    # Exact normalization (no approx reciprocal) so rows sum to 1 within f32 eps.
    # TODO(synk): output last dim (num_actions) < 128 lanes -> masked vst; byte
    # count is tiny so we keep the natural [B, A] interface instead of lane-padding.
    o_ref[...] = (e / denom).astype(o_ref.dtype)


def _round_up(x: int, m: int) -> int:
    return (x + m - 1) // m * m


def next_best_action_policy(state, w_in, b_in, w_out, b_out):
    """Fused Linear->ReLU->Linear->Softmax.

    state: [B, state_dim] float32
    w_in : [state_dim, hidden_dim]    (transposed vs torch Linear.weight)
    b_in : [hidden_dim]
    w_out: [hidden_dim, num_actions]  (transposed vs torch Linear.weight)
    b_out: [num_actions]
    returns: [B, num_actions] float32 probabilities
    """
    B, S = state.shape
    H = w_in.shape[1]
    A = w_out.shape[1]

    # Batch tile: 256 rows fills the v6e/v7x MXU (multiple of 128 for v5e);
    # for small batches just round up to the 8-sublane granule.
    TB = 256 if B >= 256 else _round_up(B, 8)
    B_pad = _round_up(B, TB)
    grid = (B_pad // TB,)

    # bf16 operands for the MXU; biases stay f32 for the f32 elementwise path.
    x = state.astype(jnp.bfloat16)
    if B_pad != B:
        x = jnp.pad(x, ((0, B_pad - B), (0, 0)))
    w1 = w_in.astype(jnp.bfloat16)
    w2 = w_out.astype(jnp.bfloat16)
    b1 = b_in.reshape(1, H).astype(jnp.float32)
    b2 = b_out.reshape(1, A).astype(jnp.float32)

    # VMEM budget (double-buffered batch-tiled operands + resident weights),
    # padded to lane/sublane granules; generous 2x headroom, capped below the
    # 64 MiB physical VMEM of v7x (32 MiB scoped default already suffices).
    lane = lambda n: max(_round_up(n, 128), 128)
    sub = lambda n: max(_round_up(n, 8), 8)
    vmem_bytes = (
        2 * TB * lane(S) * 2          # state tiles, bf16, double-buffered
        + 2 * TB * lane(A) * 4        # output tiles, f32, double-buffered
        + sub(S) * lane(H) * 2        # w_in resident
        + sub(H) * lane(A) * 2        # w_out resident
        + 2 * 8 * (lane(H) + lane(A)) * 4  # biases (double-buffered, padded)
        + TB * (lane(H) + lane(A)) * 4     # in-kernel f32 intermediates
    )
    vmem_limit = min(max(2 * vmem_bytes, 4 << 20), 48 << 20)

    cost = pl.CostEstimate(
        flops=2 * B_pad * (S * H + H * A),
        transcendentals=B_pad * A,
        bytes_accessed=(B_pad * S * 2 + (S * H + H * A) * 2 + (H + A) * 4 + B_pad * A * 4),
    )

    out = pl.pallas_call(
        _policy_kernel,
        out_shape=jax.ShapeDtypeStruct((B_pad, A), jnp.float32),
        grid_spec=pltpu.PrefetchScalarGridSpec(
            num_scalar_prefetch=0,
            grid=grid,
            in_specs=[
                pl.BlockSpec((TB, S), lambda i: (i, 0)),   # state: batch-tiled
                pl.BlockSpec((S, H), lambda i: (0, 0)),    # w_in : resident
                pl.BlockSpec((1, H), lambda i: (0, 0)),    # b_in : resident
                pl.BlockSpec((H, A), lambda i: (0, 0)),    # w_out: resident
                pl.BlockSpec((1, A), lambda i: (0, 0)),    # b_out: resident
            ],
            out_specs=pl.BlockSpec((TB, A), lambda i: (i, 0)),
        ),
        compiler_params=pltpu.CompilerParams(
            dimension_semantics=("parallel",),  # shard batch tiles across TCs (v7x)
            vmem_limit_bytes=vmem_limit,
        ),
        cost_estimate=cost,
    )(x, w1, b1, w2, b2)

    return out[:B] if B_pad != B else out


def _reference(state, w_in, b_in, w_out, b_out):
    # Same quantization scheme as the kernel (bf16 MXU operands, f32 accumulate).
    xb = state.astype(jnp.bfloat16)
    w1b = w_in.astype(jnp.bfloat16)
    w2b = w_out.astype(jnp.bfloat16)
    h = jnp.maximum(jnp.dot(xb, w1b, preferred_element_type=jnp.float32) + b_in, 0.0)
    logits = jnp.dot(h.astype(jnp.bfloat16), w2b, preferred_element_type=jnp.float32) + b_out
    return jax.nn.softmax(logits, axis=1)


if __name__ == "__main__":
    # Small shapes consistent with the module's forward.
    B, state_dim, hidden_dim, num_actions = 8, 32, 64, 16

    key = jax.random.PRNGKey(0)
    k_x, k_w1, k_w2 = jax.random.split(key, 3)

    state = jax.random.normal(k_x, (B, state_dim), dtype=jnp.float32)

    # Deterministic kaiming-normal-style init (fan_in, relu): std = sqrt(2/fan_in).
    w_in = jax.random.normal(k_w1, (state_dim, hidden_dim), dtype=jnp.float32) * jnp.sqrt(
        2.0 / state_dim
    )
    b_in = jnp.zeros((hidden_dim,), dtype=jnp.float32)
    w_out = jax.random.normal(k_w2, (hidden_dim, num_actions), dtype=jnp.float32) * jnp.sqrt(
        2.0 / hidden_dim
    )
    b_out = jnp.zeros((num_actions,), dtype=jnp.float32)

    fn = jax.jit(next_best_action_policy)
    out = fn(state, w_in, b_in, w_out, b_out)
    out = jax.block_until_ready(out)

    ref = _reference(state, w_in, b_in, w_out, b_out)
    assert out.shape == (B, num_actions)
    assert jnp.allclose(out, ref, atol=2e-3, rtol=2e-3), float(jnp.max(jnp.abs(out - ref)))
    assert jnp.allclose(jnp.sum(out, axis=1), 1.0, atol=2e-3), float(
        jnp.max(jnp.abs(jnp.sum(out, axis=1) - 1.0))
    )

    # Also exercise the multi-tile / padded-batch path (grid > 1, B not a tile multiple).
    B2 = 300
    state2 = jax.random.normal(jax.random.PRNGKey(1), (B2, state_dim), dtype=jnp.float32)
    out2 = jax.block_until_ready(fn(state2, w_in, b_in, w_out, b_out))
    ref2 = _reference(state2, w_in, b_in, w_out, b_out)
    assert out2.shape == (B2, num_actions)
    assert jnp.allclose(out2, ref2, atol=2e-3, rtol=2e-3), float(jnp.max(jnp.abs(out2 - ref2)))
    assert jnp.allclose(jnp.sum(out2, axis=1), 1.0, atol=2e-3)

    print("KERNEL_OK")
</pallas_src>

<mosaic_0001>
module attributes {stable_mosaic.version = 11 : i64} {
  func.func @_policy_kernel(%arg0: i32, %arg1: memref<8x32xbf16, #tpu.memory_space<vmem>>, %arg2: memref<32x64xbf16, #tpu.memory_space<vmem>>, %arg3: memref<1x64xf32, #tpu.memory_space<vmem>>, %arg4: memref<64x16xbf16, #tpu.memory_space<vmem>>, %arg5: memref<1x16xf32, #tpu.memory_space<vmem>>, %arg6: memref<8x16xf32, #tpu.memory_space<vmem>>) attributes {dimension_semantics = [#tpu.dimension_semantics<parallel>], iteration_bounds = array<i64: 1>, scalar_prefetch = 0 : i64, scratch_operands = 0 : i64, tpu.core_type = #tpu.core_type<tc>, window_params = [{transform_indices = @transform_0, window_bounds = array<i64: 8, 32>}, {pipeline_mode = #tpu.pipeline_mode<synchronous>, transform_indices = @transform_1, window_bounds = array<i64: 32, 64>}, {pipeline_mode = #tpu.pipeline_mode<synchronous>, transform_indices = @transform_2, window_bounds = array<i64: 1, 64>}, {pipeline_mode = #tpu.pipeline_mode<synchronous>, transform_indices = @transform_3, window_bounds = array<i64: 64, 16>}, {pipeline_mode = #tpu.pipeline_mode<synchronous>, transform_indices = @transform_4, window_bounds = array<i64: 1, 16>}, {transform_indices = @transform_5, window_bounds = array<i64: 8, 16>}]} {
    %c0 = arith.constant 0 : index
    %c0_0 = arith.constant 0 : index
    %0 = vector.load %arg1[%c0, %c0_0] : memref<8x32xbf16, #tpu.memory_space<vmem>>, vector<8x32xbf16>
    %c0_1 = arith.constant 0 : index
    %c0_2 = arith.constant 0 : index
    %1 = vector.load %arg2[%c0_1, %c0_2] : memref<32x64xbf16, #tpu.memory_space<vmem>>, vector<32x64xbf16>
    %cst = arith.constant dense<0.000000e+00> : vector<8x64xf32>
    %2 = tpu.matmul %0, %1, %cst {dimension_numbers = #tpu.dot_dimension_numbers<[1], [0], [0], [1], [0, 0, 1, 1], [], []>} : vector<8x32xbf16>, vector<32x64xbf16>, vector<8x64xf32> -> vector<8x64xf32>
    %c0_3 = arith.constant 0 : index
    %c0_4 = arith.constant 0 : index
    %3 = vector.load %arg3[%c0_3, %c0_4] : memref<1x64xf32, #tpu.memory_space<vmem>>, vector<1x64xf32>
    %4 = vector.broadcast %3 : vector<1x64xf32> to vector<8x64xf32>
    %5 = arith.addf %2, %4 : vector<8x64xf32>
    %cst_5 = arith.constant 0.000000e+00 : f32
    %6 = vector.broadcast %cst_5 : f32 to vector<8x64xf32>
    %7 = arith.maximumf %5, %6 : vector<8x64xf32>
    %8 = arith.truncf %7 : vector<8x64xf32> to vector<8x64xbf16>
    %c0_6 = arith.constant 0 : index
    %c0_7 = arith.constant 0 : index
    %9 = vector.load %arg4[%c0_6, %c0_7] : memref<64x16xbf16, #tpu.memory_space<vmem>>, vector<64x16xbf16>
    %cst_8 = arith.constant dense<0.000000e+00> : vector<8x16xf32>
    %10 = tpu.matmul %8, %9, %cst_8 {dimension_numbers = #tpu.dot_dimension_numbers<[1], [0], [0], [1], [0, 0, 1, 1], [], []>} : vector<8x64xbf16>, vector<64x16xbf16>, vector<8x16xf32> -> vector<8x16xf32>
    %c0_9 = arith.constant 0 : index
    %c0_10 = arith.constant 0 : index
    %11 = vector.load %arg5[%c0_9, %c0_10] : memref<1x16xf32, #tpu.memory_space<vmem>>, vector<1x16xf32>
    %12 = vector.broadcast %11 : vector<1x16xf32> to vector<8x16xf32>
    %13 = arith.addf %10, %12 : vector<8x16xf32>
    %cst_11 = arith.constant dense<0xFF800000> : vector<8xf32>
    %14 = vector.multi_reduction <maximumf>, %13, %cst_11 [1] : vector<8x16xf32> to vector<8xf32>
    %15 = vector.shape_cast %14 : vector<8xf32> to vector<8x1xf32>
    %16 = vector.broadcast %15 : vector<8x1xf32> to vector<8x16xf32>
    %17 = arith.subf %13, %16 : vector<8x16xf32>
    %18 = math.exp %17 : vector<8x16xf32>
    %cst_12 = arith.constant dense<0.000000e+00> : vector<8xf32>
    %19 = vector.multi_reduction <add>, %18, %cst_12 [1] : vector<8x16xf32> to vector<8xf32>
    %20 = vector.shape_cast %19 : vector<8xf32> to vector<8x1xf32>
    %21 = vector.broadcast %20 : vector<8x1xf32> to vector<8x16xf32>
    %22 = arith.divf %18, %21 : vector<8x16xf32>
    %c0_13 = arith.constant 0 : index
    %c0_14 = arith.constant 0 : index
    %23 = vector.load %arg6[%c0_13, %c0_14] : memref<8x16xf32, #tpu.memory_space<vmem>>, vector<8x16xf32>
    tpu.vector_store %arg6[%c0_13, %c0_14], %22 {strides = array<i32>} : memref<8x16xf32, #tpu.memory_space<vmem>>, vector<8x16xf32>,
    return
  }
  func.func @transform_0(%arg0: i32) -> (i32, i32) {
    %c0_i32 = arith.constant 0 : i32
    %c0_i32_0 = arith.constant 0 : i32
    return %arg0, %c0_i32 : i32, i32
  }
  func.func @transform_1(%arg0: i32) -> (i32, i32) {
    %c0_i32 = arith.constant 0 : i32
    %c0_i32_0 = arith.constant 0 : i32
    %c0_i32_1 = arith.constant 0 : i32
    return %c0_i32, %c0_i32_0 : i32, i32
  }
  func.func @transform_2(%arg0: i32) -> (i32, i32) {
    %c0_i32 = arith.constant 0 : i32
    %c0_i32_0 = arith.constant 0 : i32
    %c0_i32_1 = arith.constant 0 : i32
    return %c0_i32, %c0_i32_0 : i32, i32
  }
  func.func @transform_3(%arg0: i32) -> (i32, i32) {
    %c0_i32 = arith.constant 0 : i32
    %c0_i32_0 = arith.constant 0 : i32
    %c0_i32_1 = arith.constant 0 : i32
    return %c0_i32, %c0_i32_0 : i32, i32
  }
  func.func @transform_4(%arg0: i32) -> (i32, i32) {
    %c0_i32 = arith.constant 0 : i32
    %c0_i32_0 = arith.constant 0 : i32
    %c0_i32_1 = arith.constant 0 : i32
    return %c0_i32, %c0_i32_0 : i32, i32
  }
  func.func @transform_5(%arg0: i32) -> (i32, i32) {
    %c0_i32 = arith.constant 0 : i32
    %c0_i32_0 = arith.constant 0 : i32
    return %arg0, %c0_i32 : i32, i32
  }
}

</mosaic_0001>

<llo_original>
// kernel: next_best_action_policy.1
$region0: #{next_best_action_policy.1}
  #allocation0 [shape = 'u32[]', space=smem, size = 0x4, offset = 0x4, fixed_abs, tag = 'smem constant byte address 0x4 - core index']
  #allocation1 [shape = 'u32[144,128]{1,0:T(1,128)}', space=vmem, size = 0x12000, scoped, tag = 'internal scratch']
  %s0 = inlined_call_operand.vmem [shape: bf16[8,32], index: 0, kind: input, shape index: {}]
  %s1 = inlined_call_operand.vmem [shape: bf16[32,64], index: 1, kind: input, shape index: {}]
  %s2 = inlined_call_operand.vmem [shape: f32[1,64], index: 2, kind: input, shape index: {}]
  %s3 = inlined_call_operand.vmem [shape: bf16[64,16], index: 3, kind: input, shape index: {}]
  %s4 = inlined_call_operand.vmem [shape: f32[1,16], index: 4, kind: input, shape index: {}]
  %s5 = inlined_call_operand.hbm [shape: f32[8,16], index: 5, kind: output, shape index: {}]
  %s6 = sld [smem:[#allocation0]]
  $region30: #{next_best_action_policy.1} parent=0
    _
  %s8 = ssub.s32 1, %s6
  %s9 = scalar_select 0, %s8, %s6
  $region1: #{next_best_action_policy.1} parent=0
    #allocation2 [shape = 'u8[4096]{0}', space=vmem, size = 0x1000, scoped, tag = 'output window, operand 0, single buffered']
    #allocation3 [shape = 's32[1]{0}', space=sflag, size = 0x4, scoped, tag = 'scoped memory for next_best_action_policy.1']
    %10 = vsyncpa [#allocation3], 0
    // Predicated region
    $region2: #{next_best_action_policy.1} parent=1 // pred_check
      _
    $region3: #{next_best_action_policy.1} parent=1 // pred_check_branch
      %12 = sbr.rel (0) target = $region5
    $region4: #{next_best_action_policy.1} parent=1 // pred_region
      _
    $region5: #{next_best_action_policy.1} parent=1 // pred_fallthru
      _
    // Predicated region
    $region6: #{next_best_action_policy.1} parent=1 // pred_check
      _
    $region7: #{next_best_action_policy.1} parent=1 // pred_check_branch
      %14 = sbr.rel (0) target = $region9
    $region8: #{next_best_action_policy.1} parent=1 // pred_region
      _
    $region9: #{next_best_action_policy.1} parent=1 // pred_fallthru
      _
    // Predicated region
    $region10: #{next_best_action_policy.1} parent=1 // pred_check
      _
    $region11: #{next_best_action_policy.1} parent=1 // pred_check_branch
      %16 = sbr.rel (0) target = $region13
    $region12: #{next_best_action_policy.1} parent=1 // pred_region
      _
    $region13: #{next_best_action_policy.1} parent=1 // pred_fallthru
      _
    // Predicated region
    $region14: #{next_best_action_policy.1} parent=1 // pred_check
      _
    $region15: #{next_best_action_policy.1} parent=1 // pred_check_branch
      %18 = sbr.rel (0) target = $region17
    $region16: #{next_best_action_policy.1} parent=1 // pred_region
      _
    $region17: #{next_best_action_policy.1} parent=1 // pred_fallthru
      _
    // Predicated region
    $region18: #{next_best_action_policy.1} parent=1 // pred_check
      _
    $region19: #{next_best_action_policy.1} parent=1 // pred_check_branch
      %20 = sbr.rel (0) target = $region21
    $region20: #{next_best_action_policy.1} parent=1 // pred_region
      _
    $region21: #{next_best_action_policy.1} parent=1 // pred_fallthru
      _
    %v22 = vld [vmem:[%s0] sm:$0xf]
    %v23 = vld [vmem:[%s1] sm:$0xf]
    %v24 = vld [vmem:[%s1 + $0x4] sm:$0xf]
    %v25 = vld [vmem:[%s1 + $0x8] sm:$0xf]
    %v26 = vld [vmem:[%s1 + $0xc] sm:$0xf]
    %v27 = vld [vmem:[%s2] sm:$0x1]
    %v29 = vlaneseq
    %v30 = vshrl.u32 %v29, 7
    %v31 = vsub.s32 0, %v30
    %v32 = vrot.slane %v27, %v31
    %v38 = vunpack.c.l.b16 %v23
    %v39 = vunpack.c.l.b16 %v24
    %v40 = vunpack.c.l.b16 %v25
    %v41 = vunpack.c.l.b16 %v26
    %v42 = vpack.c.b16 %v39, %v38
    %v43 = vpack.c.b16 %v41, %v40
    %vm46 = vcmask 261120
    %v48 = vsel %vm46, %v22, 0
    %50 = vmatprep.subr.bf16.mxu0 0
    %51 = vmatpush1.bf16.msra.mxu0 %v42
    %52 = vmatprep.subr.bf16.mxu0 0
    %53 = vmatpush1.bf16.msra.mxu0 %v43
    %54 = vmatprep.subr.bf16.mxu0 0
    %55 = vmatpush1.bf16.msra.mxu0 0
    %56 = vmatprep.subr.bf16.mxu0 0
    %57 = vmatpush1.bf16.msra.mxu0 0
    %58 = vmatprep.subr.bf16.mxu0 0
    %59 = vmatpush1.bf16.msra.mxu0 0
    %60 = vmatprep.subr.bf16.mxu0 0
    %61 = vmatpush1.bf16.msra.mxu0 0
    %62 = vmatprep.subr.bf16.mxu0 0
    %63 = vmatpush1.bf16.msra.mxu0 0
    %64 = vmatprep.subr.bf16.mxu0 0
    %65 = vmatpush1.bf16.msra.mxu0 0
    %66 = vmatprep.subr.bf16.mxu0 0
    %67 = vmatpush1.bf16.msra.mxu0 0
    %68 = vmatprep.subr.bf16.mxu0 0
    %69 = vmatpush1.bf16.msra.mxu0 0
    %70 = vmatprep.subr.bf16.mxu0 0
    %71 = vmatpush1.bf16.msra.mxu0 0
    %72 = vmatprep.subr.bf16.mxu0 0
    %73 = vmatpush1.bf16.msra.mxu0 0
    %74 = vmatprep.subr.bf16.mxu0 0
    %75 = vmatpush1.bf16.msra.mxu0 0
    %76 = vmatprep.subr.bf16.mxu0 0
    %77 = vmatpush1.bf16.msra.mxu0 0
    %78 = vmatprep.subr.bf16.mxu0 0
    %79 = vmatpush1.bf16.msra.mxu0 0
    %80 = vmatprep.subr.bf16.mxu0 0
    %81 = vmatpush1.bf16.msra.mxu0 0
    %82 = vmatprep.mubr.bf16.mxu0 0
    %83 = vmatmul.mubr.bf16.gmra.mrb[0].mxu0 %v48
    %v84 = vpop.f32.mrb[0].mxu0
    %v85 = vadd.f32 %v32, %v84
    %v86 = vpop.f32.mrb[0].mxu0
    %v87 = vpop.f32.mrb[0].mxu0
    %v88 = vpop.f32.mrb[0].mxu0
    %89 = vdwg.mxu0
    %v90 = vmax.f32 %v85, 0.0
    %v91 = vpack.c.bf16 %v90, %v90
    %v92 = vld [vmem:[%s3] sm:$0xf]
    %v93 = vld [vmem:[%s3 + $0x4] sm:$0xf]
    %v94 = vld [vmem:[%s3 + $0x8] sm:$0xf]
    %v95 = vld [vmem:[%s3 + $0xc] sm:$0xf]
    %v96 = vld [vmem:[%s3 + $0x10] sm:$0xf]
    %v97 = vld [vmem:[%s3 + $0x14] sm:$0xf]
    %v98 = vld [vmem:[%s3 + $0x18] sm:$0xf]
    %v99 = vld [vmem:[%s3 + $0x1c] sm:$0xf]
    %v100 = vld [vmem:[%s4] sm:$0x1]
    %v102 = vlaneseq
    %v103 = vshrl.u32 %v102, 7
    %v104 = vsub.s32 0, %v103
    %v105 = vrot.slane %v100, %v104
    %v115 = vunpack.c.l.b16 %v92
    %v116 = vunpack.c.l.b16 %v93
    %v117 = vunpack.c.l.b16 %v94
    %v118 = vunpack.c.l.b16 %v95
    %v119 = vunpack.c.l.b16 %v96
    %v120 = vunpack.c.l.b16 %v97
    %v121 = vunpack.c.l.b16 %v98
    %v122 = vunpack.c.l.b16 %v99
    %v123 = vpack.c.b16 %v116, %v115
    %v124 = vpack.c.b16 %v118, %v117
    %v125 = vpack.c.b16 %v120, %v119
    %v126 = vpack.c.b16 %v122, %v121
    %vm131 = vcmask 523264
    %v133 = vsel %vm131, %v91, 0
    %135 = vmatprep.subr.bf16.mxu0 0
    %136 = vmatpush1.bf16.msra.mxu0 %v123
    %137 = vmatprep.subr.bf16.mxu0 0
    %138 = vmatpush1.bf16.msra.mxu0 %v124
    %139 = vmatprep.subr.bf16.mxu0 0
    %140 = vmatpush1.bf16.msra.mxu0 %v125
    %141 = vmatprep.subr.bf16.mxu0 0
    %142 = vmatpush1.bf16.msra.mxu0 %v126
    %143 = vmatprep.subr.bf16.mxu0 0
    %144 = vmatpush1.bf16.msra.mxu0 0
    %145 = vmatprep.subr.bf16.mxu0 0
    %146 = vmatpush1.bf16.msra.mxu0 0
    %147 = vmatprep.subr.bf16.mxu0 0
    %148 = vmatpush1.bf16.msra.mxu0 0
    %149 = vmatprep.subr.bf16.mxu0 0
    %150 = vmatpush1.bf16.msra.mxu0 0
    %151 = vmatprep.subr.bf16.mxu0 0
    %152 = vmatpush1.bf16.msra.mxu0 0
    %153 = vmatprep.subr.bf16.mxu0 0
    %154 = vmatpush1.bf16.msra.mxu0 0
    %155 = vmatprep.subr.bf16.mxu0 0
    %156 = vmatpush1.bf16.msra.mxu0 0
    %157 = vmatprep.subr.bf16.mxu0 0
    %158 = vmatpush1.bf16.msra.mxu0 0
    %159 = vmatprep.subr.bf16.mxu0 0
    %160 = vmatpush1.bf16.msra.mxu0 0
    %161 = vmatprep.subr.bf16.mxu0 0
    %162 = vmatpush1.bf16.msra.mxu0 0
    %163 = vmatprep.subr.bf16.mxu0 0
    %164 = vmatpush1.bf16.msra.mxu0 0
    %165 = vmatprep.subr.bf16.mxu0 0
    %166 = vmatpush1.bf16.msra.mxu0 0
    %167 = vmatprep.mubr.bf16.mxu0 0
    %168 = vmatmul.mubr.bf16.gmra.mrb[0].mxu0 %v133
    %v169 = vpop.f32.mrb[0].mxu0
    %v170 = vadd.f32 %v105, %v169
    %v171 = vpop.f32.mrb[0].mxu0
    %v172 = vpop.f32.mrb[0].mxu0
    %v173 = vpop.f32.mrb[0].mxu0
    %174 = vdwg.mxu0
    %vm175 = vcmask 130048
    %v176 = vsel %vm175, %v170, -inf
    %177 = vmax.xlane.f32.xlu0 %v176
    %v178 = vpop.xlane.xlu0 %177
    %v179 = vsub.f32 %v170, %v178
    %v180 = vmul.f32 %v179, 1.442695
    %v181 = vpow.pop %v180
    %v182 = vsel %vm175, %v181, 0.0
    %183 = vadd.xlane.f32.xlu0 %v182
    %v184 = vpop.xlane.xlu0 %183
    %v185 = vrcp.pop %v184
    %v186 = vmul.f32 %v181, %v185
    %187 = vst.msk [vmem:[#allocation2] sm:$0xff] %vm175, %v186
    // Predicated region
    $region22: #{next_best_action_policy.1} parent=1 // pred_check
      _
    $region23: #{next_best_action_policy.1} parent=1 // pred_check_branch
      %189 = sbr.rel (0) target = $region25
    $region24: #{next_best_action_policy.1} parent=1 // pred_region
      %s191 = ssub.s32 128, 128
      %192 = vsyncadd [#allocation3], %s191
      %s194 = sshll.u32 [#allocation2], 4
      %s195 = int_to_ptr.vmem [resolvable:$true] %s194
      %197 = dma.vmem_to_hbm [thread:$0]  %s195, 128, %s5, [#allocation3]
    $region25: #{next_best_action_policy.1} parent=1 // pred_fallthru
      _
    // Predicated region
    $region26: #{next_best_action_policy.1} parent=1 // pred_check
      _
    $region27: #{next_best_action_policy.1} parent=1 // pred_check_branch
      %199 = sbr.rel (0) target = $region29
    $region28: #{next_best_action_policy.1} parent=1 // pred_region
      %200 = dma.done [#allocation3], 128
    $region29: #{next_best_action_policy.1} parent=1 // pred_fallthru
      _
    %201 = vsyncpa [#allocation3], 1

</llo_original>
